<compile_context>
chip_gen: v7x
topology: tpu7x:2x2x1
jax: 0.10.0
libtpu: 0.0.40
codegen_flags: <defaults>
</compile_context>

<pallas_src>
import jax
import jax.numpy as jnp
from jax.experimental import pallas as pl
from jax.experimental.pallas import tpu as pltpu

NUM_MSD = 8          # len(self.msd)
DROP_P = 0.5         # nn.Dropout(0.5)
HIDDEN = 768         # BERT hidden size (nn.Linear(768, num_classes))
NUM_CLASSES = 4
PAD_CLASSES = 128    # lane-dense padded class dim
NEG_INF = -1e30      # bias padding -> exp underflows to exactly 0


def msd_head_kernel(xrep_ref, bits_ref, wt_ref, b_ref, red_ref, out_ref):
    """Fused multi-sample-dropout head (all 8 samples in one pass).

    xrep_ref : VMEM (8B, H)   f32   CLS activations, replicated per sample
    bits_ref : VMEM (8B, H)   i32   raw random words (dropout source)
    wt_ref   : VMEM (H, 128)  f32   weight^T * 1/(1-p), zero-padded cols
    b_ref    : VMEM (1, 128)  f32   bias, padded with -1e30
    red_ref  : VMEM (B, 8B)   f32   sample-averaging matrix (entries 1/8)
    out_ref  : VMEM (B, 128)  f32   averaged softmax probabilities (padded)
    """
    xrep = xrep_ref[...]                                   # (8B, H)

    # Dropout(0.5): keep element iff sign bit of its random word is 0 (p=1/2).
    keep = bits_ref[...] >= 0                              # (8B, H) bool
    xd = jnp.where(keep, xrep, jnp.float32(0.0))           # 1/(1-p) folded in W

    # Linear: one batched MXU matmul over all 8 samples, lane-dense output.
    logits = jnp.dot(xd, wt_ref[...], preferred_element_type=jnp.float32)
    logits = logits + b_ref[...]                           # padded lanes -> -1e30

    # Row-stable softmax over the (padded) class dim.
    m = jnp.max(logits, axis=1, keepdims=True)
    e = jnp.exp(logits - m)
    denom = jnp.sum(e, axis=1, keepdims=True)
    if jax.default_backend() == "tpu":
        p = e * pl.reciprocal(denom, approx=True)          # EUP slot (idle here)
    else:
        p = e / denom                                      # interpret-mode safe
    # Mean over the 8 dropout samples via a tiny (B,8B)@(8B,128) matmul.
    out_ref[...] = jnp.dot(red_ref[...], p, preferred_element_type=jnp.float32)


def msd_classifier_head(bert_seq_out, weight, bias, dropout_bits):
    """Slice CLS token, prepare padded/scaled operands, call the Pallas kernel.

    bert_seq_out : (B, S, H) f32   simulated BERT sequence output
    weight       : (C, H)    f32   nn.Linear weight (torch layout)
    bias         : (C,)      f32   nn.Linear bias
    dropout_bits : (8B, H)   i32   raw random words for the 8 dropout masks
    Returns (out, None) matching the PyTorch forward with loss_func=None.
    """
    assert DROP_P == 0.5  # sign-bit dropout test assumes p == 0.5
    x_cls = bert_seq_out[:, 0, :].astype(jnp.float32)      # output[:, 0, :]
    B, H = x_cls.shape
    C = weight.shape[0]

    # Weight^T with the inverted-dropout scale folded in, zero-padded to 128.
    inv_keep = 1.0 / (1.0 - DROP_P)
    wt = jnp.transpose(weight).astype(jnp.float32) * jnp.float32(inv_keep)
    wt_pad = jnp.zeros((H, PAD_CLASSES), jnp.float32).at[:, :C].set(wt)
    b_pad = jnp.full((1, PAD_CLASSES), NEG_INF, jnp.float32).at[0, :C].set(
        bias.astype(jnp.float32))

    # 8 dropout samples of the same activations, sample-major row order.
    x_rep = jnp.broadcast_to(x_cls[None], (NUM_MSD, B, H)).reshape(NUM_MSD * B, H)

    # (B, 8B) matrix that averages the 8 samples of each batch row.
    cols = jnp.arange(NUM_MSD * B)[None, :]
    rows = jnp.arange(B)[:, None]
    red = (cols % B == rows).astype(jnp.float32) / jnp.float32(NUM_MSD)

    out_pad = pl.pallas_call(
        msd_head_kernel,
        out_shape=jax.ShapeDtypeStruct((B, PAD_CLASSES), jnp.float32),
        in_specs=[
            pl.BlockSpec(memory_space=pltpu.MemorySpace.VMEM),  # x_rep
            pl.BlockSpec(memory_space=pltpu.MemorySpace.VMEM),  # dropout bits
            pl.BlockSpec(memory_space=pltpu.MemorySpace.VMEM),  # wt_pad
            pl.BlockSpec(memory_space=pltpu.MemorySpace.VMEM),  # b_pad
            pl.BlockSpec(memory_space=pltpu.MemorySpace.VMEM),  # red
        ],
        out_specs=pl.BlockSpec(memory_space=pltpu.MemorySpace.VMEM),
    )(x_rep, dropout_bits, wt_pad, b_pad, red)

    # TODO(synk): loss_func / labels branch (averaged cross-entropy) not implemented.
    return out_pad[:, :C], None


if __name__ == "__main__":
    key = jax.random.PRNGKey(0)
    k_bert, k_w, k_drop = jax.random.split(key, 3)

    B, S = 2, 8  # small batch / sequence length

    # Simulated BERT sequence output (stand-in for AutoModel forward).
    bert_seq_out = jax.random.normal(k_bert, (B, S, HIDDEN), dtype=jnp.float32)

    # nn.Linear(768, num_classes): weight ~ N(0, 0.02), bias = 0.
    weight = 0.02 * jax.random.normal(k_w, (NUM_CLASSES, HIDDEN), dtype=jnp.float32)
    bias = jnp.zeros((NUM_CLASSES,), dtype=jnp.float32)

    # Raw random words for the 8 dropout masks (deterministic).
    dropout_bits = jax.lax.bitcast_convert_type(
        jax.random.bits(k_drop, (NUM_MSD * B, HIDDEN), dtype=jnp.uint32),
        jnp.int32)

    out, _ = msd_classifier_head(bert_seq_out, weight, bias, dropout_bits)
    out = jax.block_until_ready(out)
    assert out.shape == (B, NUM_CLASSES)

    # Pure-JAX reference using the identical dropout masks.
    x_cls = bert_seq_out[:, 0, :]
    keep = (dropout_bits >= 0).astype(jnp.float32)
    x_rep = jnp.broadcast_to(
        x_cls[None], (NUM_MSD, B, HIDDEN)).reshape(NUM_MSD * B, HIDDEN)
    logits = (x_rep * keep * 2.0) @ weight.T + bias
    probs = jax.nn.softmax(logits, axis=-1)
    ref = probs.reshape(NUM_MSD, B, NUM_CLASSES).mean(axis=0)

    assert jnp.allclose(out, ref, atol=2e-3, rtol=2e-3)
    row_sums = jnp.sum(out, axis=1)
    assert jnp.allclose(row_sums, jnp.ones_like(row_sums), atol=1e-2)

    print("KERNEL_OK")
</pallas_src>

<mosaic_0001>
module attributes {stable_mosaic.version = 11 : i64} {
  func.func @msd_head_kernel(%arg0: memref<16x768xf32, #tpu.memory_space<vmem>>, %arg1: memref<16x768xi32, #tpu.memory_space<vmem>>, %arg2: memref<768x128xf32, #tpu.memory_space<vmem>>, %arg3: memref<1x128xf32, #tpu.memory_space<vmem>>, %arg4: memref<2x16xf32, #tpu.memory_space<vmem>>, %arg5: memref<2x128xf32, #tpu.memory_space<vmem>>) attributes {dimension_semantics = [], scalar_prefetch = 0 : i64, scratch_operands = 0 : i64, tpu.core_type = #tpu.core_type<tc>} {
    %c0 = arith.constant 0 : index
    %c0_0 = arith.constant 0 : index
    %0 = vector.load %arg0[%c0, %c0_0] : memref<16x768xf32, #tpu.memory_space<vmem>>, vector<16x768xf32>
    %c0_1 = arith.constant 0 : index
    %c0_2 = arith.constant 0 : index
    %1 = vector.load %arg1[%c0_1, %c0_2] : memref<16x768xi32, #tpu.memory_space<vmem>>, vector<16x768xi32>
    %c0_i32 = arith.constant 0 : i32
    %2 = vector.broadcast %c0_i32 : i32 to vector<16x768xi32>
    %3 = arith.cmpi sge, %1, %2 : vector<16x768xi32>
    %cst = arith.constant 0.000000e+00 : f32
    %4 = vector.broadcast %cst : f32 to vector<16x768xf32>
    %5 = arith.select %3, %0, %4 : vector<16x768xi1>, vector<16x768xf32>
    %c0_3 = arith.constant 0 : index
    %c0_4 = arith.constant 0 : index
    %6 = vector.load %arg2[%c0_3, %c0_4] : memref<768x128xf32, #tpu.memory_space<vmem>>, vector<768x128xf32>
    %cst_5 = arith.constant dense<0.000000e+00> : vector<16x128xf32>
    %7 = tpu.matmul %5, %6, %cst_5 {dimension_numbers = #tpu.dot_dimension_numbers<[1], [0], [0], [1], [0, 0, 1, 1], [], []>} : vector<16x768xf32>, vector<768x128xf32>, vector<16x128xf32> -> vector<16x128xf32>
    %c0_6 = arith.constant 0 : index
    %c0_7 = arith.constant 0 : index
    %8 = vector.load %arg3[%c0_6, %c0_7] : memref<1x128xf32, #tpu.memory_space<vmem>>, vector<1x128xf32>
    %9 = vector.broadcast %8 : vector<1x128xf32> to vector<16x128xf32>
    %10 = arith.addf %7, %9 : vector<16x128xf32>
    %cst_8 = arith.constant dense<0xFF800000> : vector<16xf32>
    %11 = vector.multi_reduction <maximumf>, %10, %cst_8 [1] : vector<16x128xf32> to vector<16xf32>
    %12 = vector.shape_cast %11 : vector<16xf32> to vector<16x1xf32>
    %13 = vector.broadcast %12 : vector<16x1xf32> to vector<16x128xf32>
    %14 = arith.subf %10, %13 : vector<16x128xf32>
    %15 = math.exp %14 : vector<16x128xf32>
    %cst_9 = arith.constant dense<0.000000e+00> : vector<16xf32>
    %16 = vector.multi_reduction <add>, %15, %cst_9 [1] : vector<16x128xf32> to vector<16xf32>
    %17 = vector.shape_cast %16 : vector<16xf32> to vector<16x1xf32>
    %18 = vector.broadcast %17 : vector<16x1xf32> to vector<16x128xf32>
    %19 = arith.divf %15, %18 : vector<16x128xf32>
    %c0_10 = arith.constant 0 : index
    %c0_11 = arith.constant 0 : index
    %20 = vector.load %arg4[%c0_10, %c0_11] : memref<2x16xf32, #tpu.memory_space<vmem>>, vector<2x16xf32>
    %cst_12 = arith.constant dense<0.000000e+00> : vector<2x128xf32>
    %21 = tpu.matmul %20, %19, %cst_12 {dimension_numbers = #tpu.dot_dimension_numbers<[1], [0], [0], [1], [0, 0, 1, 1], [], []>} : vector<2x16xf32>, vector<16x128xf32>, vector<2x128xf32> -> vector<2x128xf32>
    %c0_13 = arith.constant 0 : index
    %c0_14 = arith.constant 0 : index
    %22 = vector.load %arg5[%c0_13, %c0_14] : memref<2x128xf32, #tpu.memory_space<vmem>>, vector<2x128xf32>
    tpu.vector_store %arg5[%c0_13, %c0_14], %21 {strides = array<i32>} : memref<2x128xf32, #tpu.memory_space<vmem>>, vector<2x128xf32>,
    return
  }
}

</mosaic_0001>

<llo_original>
// kernel: tpu_custom_call.1
$region0: #{tpu_custom_call.1}
  #allocation0 [shape = 'u32[]', space=smem, size = 0x4, offset = 0x4, fixed_abs, tag = 'smem constant byte address 0x4 - core index']
  #allocation1 [shape = 'u32[144,128]{1,0:T(1,128)}', space=vmem, size = 0x12000, scoped, tag = 'internal scratch']
  %s0 = inlined_call_operand.hbm [shape: f32[16,768], index: 0, kind: input, shape index: {}]
  %s1 = inlined_call_operand.hbm [shape: s32[16,768], index: 1, kind: input, shape index: {}]
  %s2 = inlined_call_operand.hbm [shape: f32[768,128], index: 2, kind: input, shape index: {}]
  %s3 = inlined_call_operand.vmem [shape: f32[1,128], index: 3, kind: input, shape index: {}]
  %s4 = inlined_call_operand.vmem [shape: f32[2,16], index: 4, kind: input, shape index: {}]
  %s5 = inlined_call_operand.hbm [shape: f32[2,128], index: 5, kind: output, shape index: {}]
  %s6 = sld [smem:[#allocation0]]
  $region42: #{tpu_custom_call.1} parent=0
    _
  %s8 = ssub.s32 1, %s6
  %s9 = scalar_select 0, %s8, %s6
  $region1: #{tpu_custom_call.1} parent=0
    #allocation2 [shape = 'u8[49152]{0}', space=vmem, size = 0xc000, scoped, tag = 'input window, operand 0, single buffered']
    #allocation3 [shape = 's32[1]{0}', space=sflag, size = 0x4, scoped, tag = 'scoped memory for tpu_custom_call.1']
    #allocation4 [shape = 's32[1]{0}', space=sflag, size = 0x4, scoped, tag = 'scoped memory for tpu_custom_call.1']
    #allocation5 [shape = 'u8[49152]{0}', space=vmem, size = 0xc000, scoped, tag = 'input window, operand 1, single buffered']
    #allocation6 [shape = 's32[1]{0}', space=sflag, size = 0x4, scoped, tag = 'scoped memory for tpu_custom_call.1']
    #allocation7 [shape = 'u8[393216]{0}', space=vmem, size = 0x60000, scoped, tag = 'input window, operand 2, single buffered']
    #allocation8 [shape = 'u8[1024]{0}', space=vmem, size = 0x400, scoped, tag = 'output window, operand 0, single buffered']
    %10 = vsyncpa [#allocation3], 0
    %11 = vsyncpa [#allocation6], 0
    %12 = vsyncpa [#allocation4], 0
    // Predicated region
    $region2: #{tpu_custom_call.1} parent=1 // pred_check
      _
    $region3: #{tpu_custom_call.1} parent=1 // pred_check_branch
      %14 = sbr.rel (0) target = $region5
    $region4: #{tpu_custom_call.1} parent=1 // pred_region
      %s16 = ssub.s32 1536, 1536
      %17 = vsyncadd [#allocation3], %s16
      %s18 = sshll.u32 [#allocation2], 4
      %s19 = int_to_ptr.vmem [resolvable:$true] %s18
      %24 = dma.hbm_to_vmem [thread:$0]  %s0, 1536, %s19, [#allocation3], 768, 768, 48
    $region5: #{tpu_custom_call.1} parent=1 // pred_fallthru
      _
    // Predicated region
    $region6: #{tpu_custom_call.1} parent=1 // pred_check
      _
    $region7: #{tpu_custom_call.1} parent=1 // pred_check_branch
      %26 = sbr.rel (0) target = $region9
    $region8: #{tpu_custom_call.1} parent=1 // pred_region
      %s28 = ssub.s32 1536, 1536
      %29 = vsyncadd [#allocation6], %s28
      %s30 = sshll.u32 [#allocation5], 4
      %s31 = int_to_ptr.vmem [resolvable:$true] %s30
      %36 = dma.hbm_to_vmem [thread:$0]  %s1, 1536, %s31, [#allocation6], 768, 768, 48
    $region9: #{tpu_custom_call.1} parent=1 // pred_fallthru
      _
    // Predicated region
    $region10: #{tpu_custom_call.1} parent=1 // pred_check
      _
    $region11: #{tpu_custom_call.1} parent=1 // pred_check_branch
      %38 = sbr.rel (0) target = $region13
    $region12: #{tpu_custom_call.1} parent=1 // pred_region
      %s40 = ssub.s32 12288, 12288
      %41 = vsyncadd [#allocation6], %s40
      %s42 = sshll.u32 [#allocation7], 4
      %s43 = int_to_ptr.vmem [resolvable:$true] %s42
      %48 = dma.hbm_to_vmem [thread:$0]  %s2, 12288, %s43, [#allocation6], 128, 128, 8
    $region13: #{tpu_custom_call.1} parent=1 // pred_fallthru
      _
    // Predicated region
    $region14: #{tpu_custom_call.1} parent=1 // pred_check
      _
    $region15: #{tpu_custom_call.1} parent=1 // pred_check_branch
      %50 = sbr.rel (0) target = $region17
    $region16: #{tpu_custom_call.1} parent=1 // pred_region
      _
    $region17: #{tpu_custom_call.1} parent=1 // pred_fallthru
      _
    // Predicated region
    $region18: #{tpu_custom_call.1} parent=1 // pred_check
      _
    $region19: #{tpu_custom_call.1} parent=1 // pred_check_branch
      %52 = sbr.rel (0) target = $region21
    $region20: #{tpu_custom_call.1} parent=1 // pred_region
      _
    $region21: #{tpu_custom_call.1} parent=1 // pred_fallthru
      _
    // Predicated region
    $region22: #{tpu_custom_call.1} parent=1 // pred_check
      _
    $region23: #{tpu_custom_call.1} parent=1 // pred_check_branch
      %54 = sbr.rel (0) target = $region25
    $region24: #{tpu_custom_call.1} parent=1 // pred_region
      %55 = dma.done [#allocation3], 1536
    $region25: #{tpu_custom_call.1} parent=1 // pred_fallthru
      _
    // Predicated region
    $region26: #{tpu_custom_call.1} parent=1 // pred_check
      _
    $region27: #{tpu_custom_call.1} parent=1 // pred_check_branch
      %57 = sbr.rel (0) target = $region29
    $region28: #{tpu_custom_call.1} parent=1 // pred_region
      %58 = dma.done [#allocation6], 1536
    $region29: #{tpu_custom_call.1} parent=1 // pred_fallthru
      _
    // Predicated region
    $region30: #{tpu_custom_call.1} parent=1 // pred_check
      _
    $region31: #{tpu_custom_call.1} parent=1 // pred_check_branch
      %60 = sbr.rel (0) target = $region33
    $region32: #{tpu_custom_call.1} parent=1 // pred_region
      %61 = dma.done [#allocation6], 12288
    $region33: #{tpu_custom_call.1} parent=1 // pred_fallthru
      _
    %v62 = vld [vmem:[#allocation2] sm:$0xff]
    %v63 = vld [vmem:[#allocation2 + $0x8] sm:$0xff]
    %v64 = vld [vmem:[#allocation2 + $0x10] sm:$0xff]
    %v65 = vld [vmem:[#allocation2 + $0x18] sm:$0xff]
    %v66 = vld [vmem:[#allocation2 + $0x20] sm:$0xff]
    %v67 = vld [vmem:[#allocation2 + $0x28] sm:$0xff]
    %v68 = vld [vmem:[#allocation2 + $0x30] sm:$0xff]
    %v69 = vld [vmem:[#allocation2 + $0x38] sm:$0xff]
    %v70 = vld [vmem:[#allocation2 + $0x40] sm:$0xff]
    %v71 = vld [vmem:[#allocation2 + $0x48] sm:$0xff]
    %v72 = vld [vmem:[#allocation2 + $0x50] sm:$0xff]
    %v73 = vld [vmem:[#allocation2 + $0x58] sm:$0xff]
    %v74 = vld [vmem:[#allocation5] sm:$0xff]
    %v75 = vld [vmem:[#allocation5 + $0x8] sm:$0xff]
    %v76 = vld [vmem:[#allocation5 + $0x10] sm:$0xff]
    %v77 = vld [vmem:[#allocation5 + $0x18] sm:$0xff]
    %v78 = vld [vmem:[#allocation5 + $0x20] sm:$0xff]
    %v79 = vld [vmem:[#allocation5 + $0x28] sm:$0xff]
    %v80 = vld [vmem:[#allocation5 + $0x30] sm:$0xff]
    %v81 = vld [vmem:[#allocation5 + $0x38] sm:$0xff]
    %v82 = vld [vmem:[#allocation5 + $0x40] sm:$0xff]
    %v83 = vld [vmem:[#allocation5 + $0x48] sm:$0xff]
    %v84 = vld [vmem:[#allocation5 + $0x50] sm:$0xff]
    %v85 = vld [vmem:[#allocation5 + $0x58] sm:$0xff]
    %vm86 = vcmp.ge.s32.totalorder %v74, 0
    %vm87 = vcmp.ge.s32.totalorder %v75, 0
    %vm88 = vcmp.ge.s32.totalorder %v76, 0
    %vm89 = vcmp.ge.s32.totalorder %v77, 0
    %vm90 = vcmp.ge.s32.totalorder %v78, 0
    %vm91 = vcmp.ge.s32.totalorder %v79, 0
    %vm92 = vcmp.ge.s32.totalorder %v80, 0
    %vm93 = vcmp.ge.s32.totalorder %v81, 0
    %vm94 = vcmp.ge.s32.totalorder %v82, 0
    %vm95 = vcmp.ge.s32.totalorder %v83, 0
    %vm96 = vcmp.ge.s32.totalorder %v84, 0
    %vm97 = vcmp.ge.s32.totalorder %v85, 0
    %v98 = vsel %vm86, %v62, 0.0
    %v99 = vsel %vm87, %v63, 0.0
    %v100 = vsel %vm88, %v64, 0.0
    %v101 = vsel %vm89, %v65, 0.0
    %v102 = vsel %vm90, %v66, 0.0
    %v103 = vsel %vm91, %v67, 0.0
    %v104 = vsel %vm92, %v68, 0.0
    %v105 = vsel %vm93, %v69, 0.0
    %v106 = vsel %vm94, %v70, 0.0
    %v107 = vsel %vm95, %v71, 0.0
    %v108 = vsel %vm96, %v72, 0.0
    %v109 = vsel %vm97, %v73, 0.0
    %v110 = vld [vmem:[#allocation7] sm:$0xff]
    %v111 = vld [vmem:[#allocation7 + $0x8] sm:$0xff]
    %v112 = vld [vmem:[#allocation7 + $0x10] sm:$0xff]
    %v113 = vld [vmem:[#allocation7 + $0x18] sm:$0xff]
    %v114 = vld [vmem:[#allocation7 + $0x20] sm:$0xff]
    %v115 = vld [vmem:[#allocation7 + $0x28] sm:$0xff]
    %v116 = vld [vmem:[#allocation7 + $0x30] sm:$0xff]
    %v117 = vld [vmem:[#allocation7 + $0x38] sm:$0xff]
    %v118 = vld [vmem:[#allocation7 + $0x40] sm:$0xff]
    %v119 = vld [vmem:[#allocation7 + $0x48] sm:$0xff]
    %v120 = vld [vmem:[#allocation7 + $0x50] sm:$0xff]
    %v121 = vld [vmem:[#allocation7 + $0x58] sm:$0xff]
    %v122 = vld [vmem:[#allocation7 + $0x60] sm:$0xff]
    %v123 = vld [vmem:[#allocation7 + $0x68] sm:$0xff]
    %v124 = vld [vmem:[#allocation7 + $0x70] sm:$0xff]
    %v125 = vld [vmem:[#allocation7 + $0x78] sm:$0xff]
    %v126 = vld [vmem:[#allocation7 + $0x80] sm:$0xff]
    %v127 = vld [vmem:[#allocation7 + $0x88] sm:$0xff]
    %v128 = vld [vmem:[#allocation7 + $0x90] sm:$0xff]
    %v129 = vld [vmem:[#allocation7 + $0x98] sm:$0xff]
    %v130 = vld [vmem:[#allocation7 + $0xa0] sm:$0xff]
    %v131 = vld [vmem:[#allocation7 + $0xa8] sm:$0xff]
    %v132 = vld [vmem:[#allocation7 + $0xb0] sm:$0xff]
    %v133 = vld [vmem:[#allocation7 + $0xb8] sm:$0xff]
    %v134 = vld [vmem:[#allocation7 + $0xc0] sm:$0xff]
    %v135 = vld [vmem:[#allocation7 + $0xc8] sm:$0xff]
    %v136 = vld [vmem:[#allocation7 + $0xd0] sm:$0xff]
    %v137 = vld [vmem:[#allocation7 + $0xd8] sm:$0xff]
    %v138 = vld [vmem:[#allocation7 + $0xe0] sm:$0xff]
    %v139 = vld [vmem:[#allocation7 + $0xe8] sm:$0xff]
    %v140 = vld [vmem:[#allocation7 + $0xf0] sm:$0xff]
    %v141 = vld [vmem:[#allocation7 + $0xf8] sm:$0xff]
    %v142 = vld [vmem:[#allocation7 + $0x100] sm:$0xff]
    %v143 = vld [vmem:[#allocation7 + $0x108] sm:$0xff]
    %v144 = vld [vmem:[#allocation7 + $0x110] sm:$0xff]
    %v145 = vld [vmem:[#allocation7 + $0x118] sm:$0xff]
    %v146 = vld [vmem:[#allocation7 + $0x120] sm:$0xff]
    %v147 = vld [vmem:[#allocation7 + $0x128] sm:$0xff]
    %v148 = vld [vmem:[#allocation7 + $0x130] sm:$0xff]
    %v149 = vld [vmem:[#allocation7 + $0x138] sm:$0xff]
    %v150 = vld [vmem:[#allocation7 + $0x140] sm:$0xff]
    %v151 = vld [vmem:[#allocation7 + $0x148] sm:$0xff]
    %v152 = vld [vmem:[#allocation7 + $0x150] sm:$0xff]
    %v153 = vld [vmem:[#allocation7 + $0x158] sm:$0xff]
    %v154 = vld [vmem:[#allocation7 + $0x160] sm:$0xff]
    %v155 = vld [vmem:[#allocation7 + $0x168] sm:$0xff]
    %v156 = vld [vmem:[#allocation7 + $0x170] sm:$0xff]
    %v157 = vld [vmem:[#allocation7 + $0x178] sm:$0xff]
    %v158 = vld [vmem:[#allocation7 + $0x180] sm:$0xff]
    %v159 = vld [vmem:[#allocation7 + $0x188] sm:$0xff]
    %v160 = vld [vmem:[#allocation7 + $0x190] sm:$0xff]
    %v161 = vld [vmem:[#allocation7 + $0x198] sm:$0xff]
    %v162 = vld [vmem:[#allocation7 + $0x1a0] sm:$0xff]
    %v163 = vld [vmem:[#allocation7 + $0x1a8] sm:$0xff]
    %v164 = vld [vmem:[#allocation7 + $0x1b0] sm:$0xff]
    %v165 = vld [vmem:[#allocation7 + $0x1b8] sm:$0xff]
    %v166 = vld [vmem:[#allocation7 + $0x1c0] sm:$0xff]
    %v167 = vld [vmem:[#allocation7 + $0x1c8] sm:$0xff]
    %v168 = vld [vmem:[#allocation7 + $0x1d0] sm:$0xff]
    %v169 = vld [vmem:[#allocation7 + $0x1d8] sm:$0xff]
    %v170 = vld [vmem:[#allocation7 + $0x1e0] sm:$0xff]
    %v171 = vld [vmem:[#allocation7 + $0x1e8] sm:$0xff]
    %v172 = vld [vmem:[#allocation7 + $0x1f0] sm:$0xff]
    %v173 = vld [vmem:[#allocation7 + $0x1f8] sm:$0xff]
    %v174 = vld [vmem:[#allocation7 + $0x200] sm:$0xff]
    %v175 = vld [vmem:[#allocation7 + $0x208] sm:$0xff]
    %v176 = vld [vmem:[#allocation7 + $0x210] sm:$0xff]
    %v177 = vld [vmem:[#allocation7 + $0x218] sm:$0xff]
    %v178 = vld [vmem:[#allocation7 + $0x220] sm:$0xff]
    %v179 = vld [vmem:[#allocation7 + $0x228] sm:$0xff]
    %v180 = vld [vmem:[#allocation7 + $0x230] sm:$0xff]
    %v181 = vld [vmem:[#allocation7 + $0x238] sm:$0xff]
    %v182 = vld [vmem:[#allocation7 + $0x240] sm:$0xff]
    %v183 = vld [vmem:[#allocation7 + $0x248] sm:$0xff]
    %v184 = vld [vmem:[#allocation7 + $0x250] sm:$0xff]
    %v185 = vld [vmem:[#allocation7 + $0x258] sm:$0xff]
    %v186 = vld [vmem:[#allocation7 + $0x260] sm:$0xff]
    %v187 = vld [vmem:[#allocation7 + $0x268] sm:$0xff]
    %v188 = vld [vmem:[#allocation7 + $0x270] sm:$0xff]
    %v189 = vld [vmem:[#allocation7 + $0x278] sm:$0xff]
    %v190 = vld [vmem:[#allocation7 + $0x280] sm:$0xff]
    %v191 = vld [vmem:[#allocation7 + $0x288] sm:$0xff]
    %v192 = vld [vmem:[#allocation7 + $0x290] sm:$0xff]
    %v193 = vld [vmem:[#allocation7 + $0x298] sm:$0xff]
    %v194 = vld [vmem:[#allocation7 + $0x2a0] sm:$0xff]
    %v195 = vld [vmem:[#allocation7 + $0x2a8] sm:$0xff]
    %v196 = vld [vmem:[#allocation7 + $0x2b0] sm:$0xff]
    %v197 = vld [vmem:[#allocation7 + $0x2b8] sm:$0xff]
    %v198 = vld [vmem:[#allocation7 + $0x2c0] sm:$0xff]
    %v199 = vld [vmem:[#allocation7 + $0x2c8] sm:$0xff]
    %v200 = vld [vmem:[#allocation7 + $0x2d0] sm:$0xff]
    %v201 = vld [vmem:[#allocation7 + $0x2d8] sm:$0xff]
    %v202 = vld [vmem:[#allocation7 + $0x2e0] sm:$0xff]
    %v203 = vld [vmem:[#allocation7 + $0x2e8] sm:$0xff]
    %v204 = vld [vmem:[#allocation7 + $0x2f0] sm:$0xff]
    %v205 = vld [vmem:[#allocation7 + $0x2f8] sm:$0xff]
    %v206 = vld [vmem:[%s3] sm:$0x1]
    %v208 = vlaneseq
    %v209 = vshrl.u32 %v208, 7
    %v210 = vsub.s32 0, %v209
    %v211 = vrot.slane %v206, %v210
    %213 = vmatprep.subr.mxu0 0.0
    %214 = vmatpush1.msra.mxu0 %v110
    %215 = vmatprep.subr.mxu0 0.0
    %216 = vmatpush1.msra.mxu0 %v111
    %217 = vmatprep.subr.mxu0 0.0
    %218 = vmatpush1.msra.mxu0 %v112
    %219 = vmatprep.subr.mxu0 0.0
    %220 = vmatpush1.msra.mxu0 %v113
    %221 = vmatprep.subr.mxu0 0.0
    %222 = vmatpush1.msra.mxu0 %v114
    %223 = vmatprep.subr.mxu0 0.0
    %224 = vmatpush1.msra.mxu0 %v115
    %225 = vmatprep.subr.mxu0 0.0
    %226 = vmatpush1.msra.mxu0 %v116
    %227 = vmatprep.subr.mxu0 0.0
    %228 = vmatpush1.msra.mxu0 %v117
    %229 = vmatprep.subr.mxu0 0.0
    %230 = vmatpush1.msra.mxu0 %v118
    %231 = vmatprep.subr.mxu0 0.0
    %232 = vmatpush1.msra.mxu0 %v119
    %233 = vmatprep.subr.mxu0 0.0
    %234 = vmatpush1.msra.mxu0 %v120
    %235 = vmatprep.subr.mxu0 0.0
    %236 = vmatpush1.msra.mxu0 %v121
    %237 = vmatprep.subr.mxu0 0.0
    %238 = vmatpush1.msra.mxu0 %v122
    %239 = vmatprep.subr.mxu0 0.0
    %240 = vmatpush1.msra.mxu0 %v123
    %241 = vmatprep.subr.mxu0 0.0
    %242 = vmatpush1.msra.mxu0 %v124
    %243 = vmatprep.subr.mxu0 0.0
    %244 = vmatpush1.msra.mxu0 %v125
    %245 = vmatprep.subr.mxu0 0.0
    %246 = vmatpush1.msra.mxu0 %v126
    %247 = vmatprep.subr.mxu0 0.0
    %248 = vmatpush1.msra.mxu0 %v127
    %249 = vmatprep.subr.mxu0 0.0
    %250 = vmatpush1.msra.mxu0 %v128
    %251 = vmatprep.subr.mxu0 0.0
    %252 = vmatpush1.msra.mxu0 %v129
    %253 = vmatprep.subr.mxu0 0.0
    %254 = vmatpush1.msra.mxu0 %v130
    %255 = vmatprep.subr.mxu0 0.0
    %256 = vmatpush1.msra.mxu0 %v131
    %257 = vmatprep.subr.mxu0 0.0
    %258 = vmatpush1.msra.mxu0 %v132
    %259 = vmatprep.subr.mxu0 0.0
    %260 = vmatpush1.msra.mxu0 %v133
    %261 = vmatprep.subr.mxu0 0.0
    %262 = vmatpush1.msra.mxu0 %v134
    %263 = vmatprep.subr.mxu0 0.0
    %264 = vmatpush1.msra.mxu0 %v135
    %265 = vmatprep.subr.mxu0 0.0
    %266 = vmatpush1.msra.mxu0 %v136
    %267 = vmatprep.subr.mxu0 0.0
    %268 = vmatpush1.msra.mxu0 %v137
    %269 = vmatprep.subr.mxu0 0.0
    %270 = vmatpush1.msra.mxu0 %v138
    %271 = vmatprep.subr.mxu0 0.0
    %272 = vmatpush1.msra.mxu0 %v139
    %273 = vmatprep.subr.mxu0 0.0
    %274 = vmatpush1.msra.mxu0 %v140
    %275 = vmatprep.subr.mxu0 0.0
    %276 = vmatpush1.msra.mxu0 %v141
    %277 = vmatprep.mubr.f32.mxu0 %v99
    %278 = vmatmul.mubr.f32.gmra.mrb[0].mxu0 %v98
    %v279 = vpop.f32.mrb[0].mxu0
    %v280 = vadd.f32 %v211, %v279
    %v281 = vpop.f32.mrb[0].mxu0
    %282 = vmatprep.mubr.f32.mxu0 %v105
    %283 = vmatmul.mubr.f32.gmra.mrb[0].mxu0 %v104
    %v284 = vpop.f32.mrb[0].mxu0
    %v285 = vadd.f32 %v211, %v284
    %v286 = vpop.f32.mrb[0].mxu0
    %287 = vdwg.mxu0
    %288 = vmatprep.subr.mxu0 0.0
    %289 = vmatpush1.msra.mxu0 %v142
    %290 = vmatprep.subr.mxu0 0.0
    %291 = vmatpush1.msra.mxu0 %v143
    %292 = vmatprep.subr.mxu0 0.0
    %293 = vmatpush1.msra.mxu0 %v144
    %294 = vmatprep.subr.mxu0 0.0
    %295 = vmatpush1.msra.mxu0 %v145
    %296 = vmatprep.subr.mxu0 0.0
    %297 = vmatpush1.msra.mxu0 %v146
    %298 = vmatprep.subr.mxu0 0.0
    %299 = vmatpush1.msra.mxu0 %v147
    %300 = vmatprep.subr.mxu0 0.0
    %301 = vmatpush1.msra.mxu0 %v148
    %302 = vmatprep.subr.mxu0 0.0
    %303 = vmatpush1.msra.mxu0 %v149
    %304 = vmatprep.subr.mxu0 0.0
    %305 = vmatpush1.msra.mxu0 %v150
    %306 = vmatprep.subr.mxu0 0.0
    %307 = vmatpush1.msra.mxu0 %v151
    %308 = vmatprep.subr.mxu0 0.0
    %309 = vmatpush1.msra.mxu0 %v152
    %310 = vmatprep.subr.mxu0 0.0
    %311 = vmatpush1.msra.mxu0 %v153
    %312 = vmatprep.subr.mxu0 0.0
    %313 = vmatpush1.msra.mxu0 %v154
    %314 = vmatprep.subr.mxu0 0.0
    %315 = vmatpush1.msra.mxu0 %v155
    %316 = vmatprep.subr.mxu0 0.0
    %317 = vmatpush1.msra.mxu0 %v156
    %318 = vmatprep.subr.mxu0 0.0
    %319 = vmatpush1.msra.mxu0 %v157
    %320 = vmatprep.subr.mxu0 0.0
    %321 = vmatpush1.msra.mxu0 %v158
    %322 = vmatprep.subr.mxu0 0.0
    %323 = vmatpush1.msra.mxu0 %v159
    %324 = vmatprep.subr.mxu0 0.0
    %325 = vmatpush1.msra.mxu0 %v160
    %326 = vmatprep.subr.mxu0 0.0
    %327 = vmatpush1.msra.mxu0 %v161
    %328 = vmatprep.subr.mxu0 0.0
    %329 = vmatpush1.msra.mxu0 %v162
    %330 = vmatprep.subr.mxu0 0.0
    %331 = vmatpush1.msra.mxu0 %v163
    %332 = vmatprep.subr.mxu0 0.0
    %333 = vmatpush1.msra.mxu0 %v164
    %334 = vmatprep.subr.mxu0 0.0
    %335 = vmatpush1.msra.mxu0 %v165
    %336 = vmatprep.subr.mxu0 0.0
    %337 = vmatpush1.msra.mxu0 %v166
    %338 = vmatprep.subr.mxu0 0.0
    %339 = vmatpush1.msra.mxu0 %v167
    %340 = vmatprep.subr.mxu0 0.0
    %341 = vmatpush1.msra.mxu0 %v168
    %342 = vmatprep.subr.mxu0 0.0
    %343 = vmatpush1.msra.mxu0 %v169
    %344 = vmatprep.subr.mxu0 0.0
    %345 = vmatpush1.msra.mxu0 %v170
    %346 = vmatprep.subr.mxu0 0.0
    %347 = vmatpush1.msra.mxu0 %v171
    %348 = vmatprep.subr.mxu0 0.0
    %349 = vmatpush1.msra.mxu0 %v172
    %350 = vmatprep.subr.mxu0 0.0
    %351 = vmatpush1.msra.mxu0 %v173
    %352 = vmatprep.mubr.f32.mxu0 %v101
    %353 = vmatmul.mubr.f32.gmra.mrb[0].mxu0 %v100
    %v354 = vpop.f32.mrb[0].mxu0
    %v355 = vadd.f32 %v280, %v354
    %v356 = vpop.f32.mrb[0].mxu0
    %357 = vmatprep.mubr.f32.mxu0 %v107
    %358 = vmatmul.mubr.f32.gmra.mrb[0].mxu0 %v106
    %v359 = vpop.f32.mrb[0].mxu0
    %v360 = vadd.f32 %v285, %v359
    %v361 = vpop.f32.mrb[0].mxu0
    %362 = vdwg.mxu0
    %363 = vmatprep.subr.mxu0 0.0
    %364 = vmatpush1.msra.mxu0 %v174
    %365 = vmatprep.subr.mxu0 0.0
    %366 = vmatpush1.msra.mxu0 %v175
    %367 = vmatprep.subr.mxu0 0.0
    %368 = vmatpush1.msra.mxu0 %v176
    %369 = vmatprep.subr.mxu0 0.0
    %370 = vmatpush1.msra.mxu0 %v177
    %371 = vmatprep.subr.mxu0 0.0
    %372 = vmatpush1.msra.mxu0 %v178
    %373 = vmatprep.subr.mxu0 0.0
    %374 = vmatpush1.msra.mxu0 %v179
    %375 = vmatprep.subr.mxu0 0.0
    %376 = vmatpush1.msra.mxu0 %v180
    %377 = vmatprep.subr.mxu0 0.0
    %378 = vmatpush1.msra.mxu0 %v181
    %379 = vmatprep.subr.mxu0 0.0
    %380 = vmatpush1.msra.mxu0 %v182
    %381 = vmatprep.subr.mxu0 0.0
    %382 = vmatpush1.msra.mxu0 %v183
    %383 = vmatprep.subr.mxu0 0.0
    %384 = vmatpush1.msra.mxu0 %v184
    %385 = vmatprep.subr.mxu0 0.0
    %386 = vmatpush1.msra.mxu0 %v185
    %387 = vmatprep.subr.mxu0 0.0
    %388 = vmatpush1.msra.mxu0 %v186
    %389 = vmatprep.subr.mxu0 0.0
    %390 = vmatpush1.msra.mxu0 %v187
    %391 = vmatprep.subr.mxu0 0.0
    %392 = vmatpush1.msra.mxu0 %v188
    %393 = vmatprep.subr.mxu0 0.0
    %394 = vmatpush1.msra.mxu0 %v189
    %395 = vmatprep.subr.mxu0 0.0
    %396 = vmatpush1.msra.mxu0 %v190
    %397 = vmatprep.subr.mxu0 0.0
    %398 = vmatpush1.msra.mxu0 %v191
    %399 = vmatprep.subr.mxu0 0.0
    %400 = vmatpush1.msra.mxu0 %v192
    %401 = vmatprep.subr.mxu0 0.0
    %402 = vmatpush1.msra.mxu0 %v193
    %403 = vmatprep.subr.mxu0 0.0
    %404 = vmatpush1.msra.mxu0 %v194
    %405 = vmatprep.subr.mxu0 0.0
    %406 = vmatpush1.msra.mxu0 %v195
    %407 = vmatprep.subr.mxu0 0.0
    %408 = vmatpush1.msra.mxu0 %v196
    %409 = vmatprep.subr.mxu0 0.0
    %410 = vmatpush1.msra.mxu0 %v197
    %411 = vmatprep.subr.mxu0 0.0
    %412 = vmatpush1.msra.mxu0 %v198
    %413 = vmatprep.subr.mxu0 0.0
    %414 = vmatpush1.msra.mxu0 %v199
    %415 = vmatprep.subr.mxu0 0.0
    %416 = vmatpush1.msra.mxu0 %v200
    %417 = vmatprep.subr.mxu0 0.0
    %418 = vmatpush1.msra.mxu0 %v201
    %419 = vmatprep.subr.mxu0 0.0
    %420 = vmatpush1.msra.mxu0 %v202
    %421 = vmatprep.subr.mxu0 0.0
    %422 = vmatpush1.msra.mxu0 %v203
    %423 = vmatprep.subr.mxu0 0.0
    %424 = vmatpush1.msra.mxu0 %v204
    %425 = vmatprep.subr.mxu0 0.0
    %426 = vmatpush1.msra.mxu0 %v205
    %427 = vmatprep.mubr.f32.mxu0 %v103
    %428 = vmatmul.mubr.f32.gmra.mrb[0].mxu0 %v102
    %v429 = vpop.f32.mrb[0].mxu0
    %v430 = vadd.f32 %v355, %v429
    %v431 = vpop.f32.mrb[0].mxu0
    %432 = vmatprep.mubr.f32.mxu0 %v109
    %433 = vmatmul.mubr.f32.gmra.mrb[0].mxu0 %v108
    %v434 = vpop.f32.mrb[0].mxu0
    %v435 = vadd.f32 %v360, %v434
    %v436 = vpop.f32.mrb[0].mxu0
    %437 = vdwg.mxu0
    %438 = vmax.xlane.f32.xlu0 %v430
    %v439 = vpop.xlane.xlu0 %438
    %440 = vmax.xlane.f32.xlu0 %v435
    %v441 = vpop.xlane.xlu0 %440
    %v442 = vsub.f32 %v430, %v439
    %v443 = vsub.f32 %v435, %v441
    %v444 = vmul.f32 %v442, 1.442695
    %v445 = vpow.pop %v444
    %v446 = vmul.f32 %v443, 1.442695
    %v447 = vpow.pop %v446
    %448 = vadd.xlane.f32.xlu0 %v445
    %v449 = vpop.xlane.xlu0 %448
    %450 = vadd.xlane.f32.xlu0 %v447
    %v451 = vpop.xlane.xlu0 %450
    %v452 = vrcp.pop %v449
    %v453 = vmul.f32 %v445, %v452
    %v454 = vrcp.pop %v451
    %v455 = vmul.f32 %v447, %v454
    %v456 = vld [vmem:[%s4] sm:$0x3]
    %vm457 = vcmask 130048
    %v459 = vsel %vm457, %v456, 0
    %461 = vmatprep.subr.mxu0 0.0
    %462 = vmatpush1.msra.mxu0 %v453
    %463 = vmatprep.subr.mxu0 0.0
    %464 = vmatpush1.msra.mxu0 %v455
    %465 = vmatprep.subr.mxu0 0.0
    %466 = vmatpush1.msra.mxu0 0.0
    %467 = vmatprep.subr.mxu0 0.0
    %468 = vmatpush1.msra.mxu0 0.0
    %469 = vmatprep.subr.mxu0 0.0
    %470 = vmatpush1.msra.mxu0 0.0
    %471 = vmatprep.subr.mxu0 0.0
    %472 = vmatpush1.msra.mxu0 0.0
    %473 = vmatprep.subr.mxu0 0.0
    %474 = vmatpush1.msra.mxu0 0.0
    %475 = vmatprep.subr.mxu0 0.0
    %476 = vmatpush1.msra.mxu0 0.0
    %477 = vmatprep.subr.mxu0 0.0
    %478 = vmatpush1.msra.mxu0 0.0
    %479 = vmatprep.subr.mxu0 0.0
    %480 = vmatpush1.msra.mxu0 0.0
    %481 = vmatprep.subr.mxu0 0.0
    %482 = vmatpush1.msra.mxu0 0.0
    %483 = vmatprep.subr.mxu0 0.0
    %484 = vmatpush1.msra.mxu0 0.0
    %485 = vmatprep.subr.mxu0 0.0
    %486 = vmatpush1.msra.mxu0 0.0
    %487 = vmatprep.subr.mxu0 0.0
    %488 = vmatpush1.msra.mxu0 0.0
    %489 = vmatprep.subr.mxu0 0.0
    %490 = vmatpush1.msra.mxu0 0.0
    %491 = vmatprep.subr.mxu0 0.0
    %492 = vmatpush1.msra.mxu0 0.0
    %493 = vmatprep.subr.mxu0 0.0
    %494 = vmatpush1.msra.mxu0 0.0
    %495 = vmatprep.subr.mxu0 0.0
    %496 = vmatpush1.msra.mxu0 0.0
    %497 = vmatprep.subr.mxu0 0.0
    %498 = vmatpush1.msra.mxu0 0.0
    %499 = vmatprep.subr.mxu0 0.0
    %500 = vmatpush1.msra.mxu0 0.0
    %501 = vmatprep.subr.mxu0 0.0
    %502 = vmatpush1.msra.mxu0 0.0
    %503 = vmatprep.subr.mxu0 0.0
    %504 = vmatpush1.msra.mxu0 0.0
    %505 = vmatprep.subr.mxu0 0.0
    %506 = vmatpush1.msra.mxu0 0.0
    %507 = vmatprep.subr.mxu0 0.0
    %508 = vmatpush1.msra.mxu0 0.0
    %509 = vmatprep.subr.mxu0 0.0
    %510 = vmatpush1.msra.mxu0 0.0
    %511 = vmatprep.subr.mxu0 0.0
    %512 = vmatpush1.msra.mxu0 0.0
    %513 = vmatprep.subr.mxu0 0.0
    %514 = vmatpush1.msra.mxu0 0.0
    %515 = vmatprep.subr.mxu0 0.0
    %516 = vmatpush1.msra.mxu0 0.0
    %517 = vmatprep.subr.mxu0 0.0
    %518 = vmatpush1.msra.mxu0 0.0
    %519 = vmatprep.subr.mxu0 0.0
    %520 = vmatpush1.msra.mxu0 0.0
    %521 = vmatprep.subr.mxu0 0.0
    %522 = vmatpush1.msra.mxu0 0.0
    %523 = vmatprep.subr.mxu0 0.0
    %524 = vmatpush1.msra.mxu0 0.0
    %525 = vmatprep.mubr.f32.mxu0 0.0
    %526 = vmatmul.mubr.f32.gmra.mrb[0].mxu0 %v459
    %v527 = vpop.f32.mrb[0].mxu0
    %v528 = vadd.f32 0.0, %v527
    %v529 = vpop.f32.mrb[0].mxu0
    %530 = vdwg.mxu0
    %531 = vst [vmem:[#allocation8] sm:$0x3] %v528
    // Predicated region
    $region34: #{tpu_custom_call.1} parent=1 // pred_check
      _
    $region35: #{tpu_custom_call.1} parent=1 // pred_check_branch
      %533 = sbr.rel (0) target = $region37
    $region36: #{tpu_custom_call.1} parent=1 // pred_region
      %s535 = ssub.s32 32, 32
      %536 = vsyncadd [#allocation4], %s535
      %s538 = sshll.u32 [#allocation8], 4
      %s539 = int_to_ptr.vmem [resolvable:$true] %s538
      %541 = dma.vmem_to_hbm [thread:$0]  %s539, 32, %s5, [#allocation4]
    $region37: #{tpu_custom_call.1} parent=1 // pred_fallthru
      _
    // Predicated region
    $region38: #{tpu_custom_call.1} parent=1 // pred_check
      _
    $region39: #{tpu_custom_call.1} parent=1 // pred_check_branch
      %543 = sbr.rel (0) target = $region41
    $region40: #{tpu_custom_call.1} parent=1 // pred_region
      %544 = dma.done [#allocation4], 32
    $region41: #{tpu_custom_call.1} parent=1 // pred_fallthru
      _
    %545 = vsyncpa [#allocation3], 1
    %546 = vsyncpa [#allocation6], 1
    %547 = vsyncpa [#allocation4], 1

</llo_original>
